<compile_context>
chip_gen: v7x
topology: tpu7x:2x2x1
jax: 0.10.0
libtpu: 0.0.40
codegen_flags: <defaults>
</compile_context>

<pallas_src>
import jax
import jax.numpy as jnp
from jax import lax
from jax.experimental import pallas as pl
from jax.experimental.pallas import tpu as pltpu


def _round_up(x, m):
    return (x + m - 1) // m * m


def _vmem_capacity_bytes():
    """Generation-aware VMEM capacity (falls back to the smallest, v7x)."""
    try:
        return int(pltpu.get_tpu_info().vmem_capacity_bytes)
    except Exception:
        return 64 * 1024 * 1024


def _pick_chunk(n, target=2048, max_chunks=8):
    """Pick an N-chunk size that divides N (chunk loop is statically unrolled)."""
    if n <= target:
        return n, 1
    min_rows = min(128, target)
    for k in range(max_chunks, 1, -1):
        if n % k == 0:
            nc = n // k
            if nc % 8 == 0 and nc >= min_rows:
                return nc, k
    # TODO(synk): masked-tail chunking for N values with no suitable divisor.
    return n, 1


def _estimate_tile_bytes(bt, n, nc, dims, cdt_size):
    """Physical (tile-padded) VMEM footprint of one batch-tile grid step."""
    cin, h1, c1, h2, cp = dims
    lane = lambda c: _round_up(max(int(c), 1), 128)
    sub = lambda r: _round_up(max(int(r), 1), 8)
    x_blk = 2 * bt * sub(cin) * lane(n) * 4                 # f32 input block, double-buffered
    feat = bt * sub(n) * lane(c1) * cdt_size                # full-N feat scratch (single copy)
    rows = sub(bt * nc)                                     # per-chunk temporaries
    chunk = rows * (lane(h1) * (4 + cdt_size)
                    + lane(c1) * (4 + cdt_size)
                    + lane(h2) * (4 + cdt_size)
                    + lane(cp) * 4)
    w = 2 * (sub(cin) * lane(h1) * 4 + 8 * lane(h1) * 4
             + sub(h1) * lane(c1) * cdt_size
             + 2 * sub(c1) * lane(h2) * cdt_size + 8 * lane(h2) * 4
             + sub(h2) * lane(cp) * cdt_size + 8 * lane(cp) * 4)
    o_blk = 2 * sub(bt) * lane(cp) * 4
    return x_blk + feat + chunk + w + o_blk


# ---------------------------------------------------------------------------
# Kernel
# ---------------------------------------------------------------------------
def _make_kernel(Bt, N, Nc, n_chunks, cdt):
    def kernel(x_ref,
               w1a_ref, b1a_ref,                 # stage-1 hidden conv (BN folded), f32
               w1b_ref,                          # stage-1 last conv (bias deferred)
               w2l_ref, w2g_ref, b2a_ref,        # stage-2 hidden conv, split local/global
               w2b_ref, b2b_ref,                 # stage-2 last conv (C_out padded)
               out_ref, feat_scr):
        C1 = w1b_ref.shape[1]
        H2 = w2l_ref.shape[1]
        Cp = w2b_ref.shape[1]

        w1a = w1a_ref[...]
        b1a = b1a_ref[...]
        w1b = w1b_ref[...]

        # ---- phase 1: stage-1 MLP per N-chunk, stash bf16 feat, running max -----
        g0 = jnp.full((Bt, C1), -jnp.inf, dtype=jnp.float32)
        for c in range(n_chunks):
            lo = c * Nc
            hs = []
            for b in range(Bt):
                xb = x_ref[b, :, lo:lo + Nc]                      # (Cin, Nc) f32, N on lanes
                # transposed contraction over Cin: x_b^T @ w1a -> (Nc, H1)
                hb = lax.dot_general(xb, w1a, (((0,), (0,)), ((), ())),
                                     preferred_element_type=jnp.float32)
                hs.append(hb)
            h = jnp.concatenate(hs, axis=0)                       # (Bt*Nc, H1)
            h = jnp.maximum(h + b1a, 0.0).astype(cdt)
            featc = jnp.dot(h, w1b, preferred_element_type=jnp.float32)   # (Bt*Nc, C1), b1b deferred
            g0 = jnp.maximum(g0, jnp.max(featc.reshape(Bt, Nc, C1), axis=1))
            feat_scr[:, lo:lo + Nc, :] = featc.astype(cdt).reshape(Bt, Nc, C1)

        # ---- rank-Bt global term (replaces concat([feat, broadcast(g)])) ---------
        # b2a_ref already contains b2a' + b1b @ (w2l' + w2g').
        glb = jnp.dot(g0.astype(cdt), w2g_ref[...],
                      preferred_element_type=jnp.float32) + b2a_ref[...]   # (Bt, H2)

        # ---- phase 2: stage-2 MLP per N-chunk with running output max -----------
        w2l = w2l_ref[...]
        w2b = w2b_ref[...]
        omax = jnp.full((Bt, Cp), -jnp.inf, dtype=jnp.float32)
        for c in range(n_chunks):
            lo = c * Nc
            featc = feat_scr[:, lo:lo + Nc, :].reshape(Bt * Nc, C1)        # single bf16 copy
            loc = jnp.dot(featc, w2l, preferred_element_type=jnp.float32)  # (Bt*Nc, H2)
            h2 = jnp.maximum(loc.reshape(Bt, Nc, H2) + glb[:, None, :], 0.0).astype(cdt)
            f2 = jnp.dot(h2.reshape(Bt * Nc, H2), w2b,
                         preferred_element_type=jnp.float32)               # (Bt*Nc, Cp), b2b deferred
            omax = jnp.maximum(omax, jnp.max(f2.reshape(Bt, Nc, Cp), axis=1))

        out_ref[0] = (omax + b2b_ref[...]).astype(out_ref.dtype)           # (Bt, Cp)

    return kernel


# ---------------------------------------------------------------------------
# Wrapper
# ---------------------------------------------------------------------------
def _prepare_params(params, compute_dtype, lane=128):
    """Fold eval-mode BN, split w2a, defer max-commuting biases, pad C_out."""
    f32 = jnp.float32
    C1 = params["w1b"].shape[1]
    C_out = params["w2b"].shape[1]
    Cp = _round_up(C_out, lane)

    # BN(conv(x)) = (x@w + b)*s + t = x@(w*s) + (b*s + t)
    w1a = (params["w1a"] * params["s1a"]).astype(f32)
    b1a = (params["b1a"] * params["s1a"] + params["t1a"]).astype(f32)
    w2a = params["w2a"] * params["s2a"]
    b2a = params["b2a"] * params["s2a"] + params["t2a"]
    w2l, w2g = w2a[:C1], w2a[C1:]

    # b1b commutes with the max pool and enters stage-2 linearly:
    # fold it into the stage-2 pre-activation bias.
    b1b = params["b1b"].astype(f32)
    b2a_eff = (b2a + b1b @ w2l + b1b @ w2g).astype(f32)

    # b2b is added after the final pooled max; pad C_out to lane-dense stores.
    w2b = jnp.pad(params["w2b"], ((0, 0), (0, Cp - C_out)))
    b2b = jnp.pad(params["b2b"], ((0, 0), (0, Cp - C_out))).astype(f32)

    cast = lambda w: w.astype(compute_dtype)
    plist = [w1a, b1a,                       # stage-1 hidden conv (kept f32, K = Cin is tiny)
             cast(params["w1b"]),            # stage-1 last conv
             cast(w2l), cast(w2g), b2a_eff,  # stage-2 hidden conv split local/global
             cast(w2b), b2b]                 # stage-2 last conv (padded)
    return plist, C_out, Cp


def pnet2stage_forward(x, params, compute_dtype=jnp.bfloat16, chunk_rows=2048):
    """x: (B, C_in, N) float32, same layout as the PyTorch forward's input."""
    B, C_in, N = x.shape
    plist, C_out, Cp = _prepare_params(params, compute_dtype)
    H1 = plist[0].shape[1]
    C1 = plist[2].shape[1]
    H2 = plist[3].shape[1]
    cdt_size = jnp.dtype(compute_dtype).itemsize

    Nc, n_chunks = _pick_chunk(N, target=chunk_rows)
    dims = (C_in, H1, C1, H2, Cp)

    cap = _vmem_capacity_bytes()
    budget = int(0.55 * cap)
    Bt = 16
    while Bt > 1 and _estimate_tile_bytes(Bt, N, Nc, dims, cdt_size) > budget:
        Bt //= 2
    Bt = min(Bt, max(1, 64 // max(1, n_chunks)))   # bound kernel unroll size
    Bt = min(Bt, B)
    if B >= 2 and -(-B // Bt) < 2:
        # keep >= 2 grid steps so both v7x TensorCores get work.
        Bt = max(1, (B + 1) // 2)
    B_pad = _round_up(B, Bt)
    G = B_pad // Bt

    xin = x.astype(jnp.float32)
    if B_pad != B:
        xin = jnp.pad(xin, ((0, B_pad - B), (0, 0), (0, 0)))

    est = _estimate_tile_bytes(Bt, N, Nc, dims, cdt_size)
    vmem_limit = int(min(int(0.9 * cap),
                         max(32 * 1024 * 1024, int(est * 1.25) + (2 << 20))))

    kernel = _make_kernel(Bt, N, Nc, n_chunks, compute_dtype)

    in_specs = [pl.BlockSpec((Bt, C_in, N), lambda g: (g, 0, 0))]
    in_specs += [pl.BlockSpec(p.shape, lambda g: (0, 0)) for p in plist]
    out_spec = pl.BlockSpec((1, Bt, Cp), lambda g: (g, 0, 0))

    flops = (2 * B_pad * N * (C_in * H1 + H1 * C1 + C1 * H2 + H2 * Cp)
             + 2 * B_pad * C1 * H2)
    bytes_accessed = (xin.size * 4
                      + sum(int(p.size) * p.dtype.itemsize for p in plist)
                      + B_pad * Cp * 4)

    out = pl.pallas_call(
        kernel,
        out_shape=jax.ShapeDtypeStruct((G, Bt, Cp), jnp.float32),
        grid=(G,),
        in_specs=in_specs,
        out_specs=out_spec,
        scratch_shapes=[pltpu.VMEM((Bt, N, C1), compute_dtype)],
        compiler_params=pltpu.CompilerParams(
            dimension_semantics=("parallel",),
            vmem_limit_bytes=vmem_limit),
        cost_estimate=pl.CostEstimate(flops=int(flops), transcendentals=0,
                                      bytes_accessed=int(bytes_accessed)),
    )(xin, *plist)
    return out.reshape(B_pad, Cp)[:B, :C_out]                    # (B, C_out)


# ---------------------------------------------------------------------------
# Parameter init + pure-JAX reference (mirrors the PyTorch module, eval-mode BN)
# ---------------------------------------------------------------------------
def init_params(key, mlp1, mlp2_tail, eps=1e-5):
    """mlp1 = [C_in, H1, C1]; full mlp2 = [2*C1] + mlp2_tail (as in the module)."""
    mlp2 = [2 * mlp1[-1]] + list(mlp2_tail)
    ks = jax.random.split(key, 12)

    def conv(kw, kb, cin, cout):
        w = 0.1 * jax.random.normal(kw, (cin, cout), jnp.float32)   # (C_in, C_out) for x @ W
        b = 0.1 * jax.random.normal(kb, (1, cout), jnp.float32)
        return w, b

    def bn(kg, kb, c):
        gamma = 1.0 + 0.1 * jax.random.normal(kg, (c,), jnp.float32)
        beta = 0.1 * jax.random.normal(kb, (c,), jnp.float32)
        mean = jnp.zeros((c,), jnp.float32)                         # PyTorch default running stats
        var = jnp.ones((c,), jnp.float32)
        scale = gamma / jnp.sqrt(var + eps)
        shift = beta - mean * scale
        return scale.reshape(1, c), shift.reshape(1, c)

    w1a, b1a = conv(ks[0], ks[1], mlp1[0], mlp1[1])
    s1a, t1a = bn(ks[2], ks[3], mlp1[1])
    w1b, b1b = conv(ks[4], ks[5], mlp1[1], mlp1[2])
    w2a, b2a = conv(ks[6], ks[7], mlp2[0], mlp2[1])
    s2a, t2a = bn(ks[8], ks[9], mlp2[1])
    w2b, b2b = conv(ks[10], ks[11], mlp2[1], mlp2[2])
    return dict(w1a=w1a, b1a=b1a, s1a=s1a, t1a=t1a, w1b=w1b, b1b=b1b,
                w2a=w2a, b2a=b2a, s2a=s2a, t2a=t2a, w2b=w2b, b2b=b2b)


def ref_forward(x, p):
    """Pure-JAX f32 reference mirroring the PyTorch forward (eval-mode BN)."""
    xt = jnp.transpose(x, (0, 2, 1))                                # (B, N, C_in)
    h = jnp.maximum((xt @ p["w1a"] + p["b1a"]) * p["s1a"] + p["t1a"], 0.0)
    feat = h @ p["w1b"] + p["b1b"]
    g = jnp.max(feat, axis=1, keepdims=True)
    feat2 = jnp.concatenate([feat, jnp.broadcast_to(g, feat.shape)], axis=-1)
    h2 = jnp.maximum((feat2 @ p["w2a"] + p["b2a"]) * p["s2a"] + p["t2a"], 0.0)
    f2 = h2 @ p["w2b"] + p["b2b"]
    return jnp.max(f2, axis=1)                                      # (B, C_out)


if __name__ == "__main__":
    B, C_in, N = 2, 4, 16
    mlp1 = [C_in, 16, 32]     # Pnet2Stage(mlp1=[4,16,32], mlp2=[32,64])
    mlp2_tail = [32, 64]      # internally becomes [2*32, 32, 64]

    key = jax.random.PRNGKey(0)
    kx, kp, kx2 = jax.random.split(key, 3)
    x = jax.random.normal(kx, (B, C_in, N), jnp.float32)
    params = init_params(kp, mlp1, mlp2_tail)
    ref = ref_forward(x, params)

    # Optimized bf16-MXU path (default).
    out_bf16 = jax.block_until_ready(pnet2stage_forward(x, params))
    assert out_bf16.shape == (B, mlp2_tail[-1])
    assert jnp.allclose(out_bf16, ref, atol=5e-2, rtol=5e-2)

    # Same kernel in full f32 for a tight numerical check.
    out_f32 = jax.block_until_ready(
        pnet2stage_forward(x, params, compute_dtype=jnp.float32))
    assert out_f32.shape == (B, mlp2_tail[-1])
    assert jnp.allclose(out_f32, ref, atol=2e-4, rtol=2e-4)

    # Exercise Bt > 1 (per-batch first-layer loop) and the N-chunk loop
    # (chunk_rows=8 -> 2 chunks of 8 points) on a second small batch.
    x2 = jax.random.normal(kx2, (4, C_in, N), jnp.float32)
    ref2 = ref_forward(x2, params)
    out2 = jax.block_until_ready(
        pnet2stage_forward(x2, params, compute_dtype=jnp.float32, chunk_rows=8))
    assert out2.shape == (4, mlp2_tail[-1])
    assert jnp.allclose(out2, ref2, atol=2e-4, rtol=2e-4)

    print("KERNEL_OK")
</pallas_src>

<mosaic_0001>
module attributes {stable_mosaic.version = 11 : i64} {
  func.func @kernel(%arg0: i32, %arg1: memref<1x4x16xf32, #tpu.memory_space<vmem>>, %arg2: memref<4x16xf32, #tpu.memory_space<vmem>>, %arg3: memref<1x16xf32, #tpu.memory_space<vmem>>, %arg4: memref<16x32xbf16, #tpu.memory_space<vmem>>, %arg5: memref<32x32xbf16, #tpu.memory_space<vmem>>, %arg6: memref<32x32xbf16, #tpu.memory_space<vmem>>, %arg7: memref<1x32xf32, #tpu.memory_space<vmem>>, %arg8: memref<32x128xbf16, #tpu.memory_space<vmem>>, %arg9: memref<1x128xf32, #tpu.memory_space<vmem>>, %arg10: memref<1x1x128xf32, #tpu.memory_space<vmem>>, %arg11: memref<1x16x32xbf16, #tpu.memory_space<vmem>>) attributes {dimension_semantics = [#tpu.dimension_semantics<parallel>], iteration_bounds = array<i64: 2>, scalar_prefetch = 0 : i64, scratch_operands = 1 : i64, tpu.core_type = #tpu.core_type<tc>, window_params = [{transform_indices = @transform_0, window_bounds = array<i64: 1, 4, 16>}, {pipeline_mode = #tpu.pipeline_mode<synchronous>, transform_indices = @transform_1, window_bounds = array<i64: 4, 16>}, {pipeline_mode = #tpu.pipeline_mode<synchronous>, transform_indices = @transform_2, window_bounds = array<i64: 1, 16>}, {pipeline_mode = #tpu.pipeline_mode<synchronous>, transform_indices = @transform_3, window_bounds = array<i64: 16, 32>}, {pipeline_mode = #tpu.pipeline_mode<synchronous>, transform_indices = @transform_4, window_bounds = array<i64: 32, 32>}, {pipeline_mode = #tpu.pipeline_mode<synchronous>, transform_indices = @transform_5, window_bounds = array<i64: 32, 32>}, {pipeline_mode = #tpu.pipeline_mode<synchronous>, transform_indices = @transform_6, window_bounds = array<i64: 1, 32>}, {pipeline_mode = #tpu.pipeline_mode<synchronous>, transform_indices = @transform_7, window_bounds = array<i64: 32, 128>}, {pipeline_mode = #tpu.pipeline_mode<synchronous>, transform_indices = @transform_8, window_bounds = array<i64: 1, 128>}, {transform_indices = @transform_9, window_bounds = array<i64: 1, 1, 128>}]} {
    %c0 = arith.constant 0 : index
    %c0_0 = arith.constant 0 : index
    %0 = vector.load %arg2[%c0, %c0_0] : memref<4x16xf32, #tpu.memory_space<vmem>>, vector<4x16xf32>
    %c0_1 = arith.constant 0 : index
    %c0_2 = arith.constant 0 : index
    %1 = vector.load %arg3[%c0_1, %c0_2] : memref<1x16xf32, #tpu.memory_space<vmem>>, vector<1x16xf32>
    %c0_3 = arith.constant 0 : index
    %c0_4 = arith.constant 0 : index
    %2 = vector.load %arg4[%c0_3, %c0_4] : memref<16x32xbf16, #tpu.memory_space<vmem>>, vector<16x32xbf16>
    %cst = arith.constant 0xFF800000 : f32
    %3 = vector.broadcast %cst : f32 to vector<1x32xf32>
    %c0_5 = arith.constant 0 : index
    %c0_6 = arith.constant 0 : index
    %c0_7 = arith.constant 0 : index
    %4 = vector.load %arg1[%c0_5, %c0_6, %c0_7] : memref<1x4x16xf32, #tpu.memory_space<vmem>>, vector<1x4x16xf32>
    %5 = vector.shape_cast %4 : vector<1x4x16xf32> to vector<4x16xf32>
    %cst_8 = arith.constant dense<0.000000e+00> : vector<16x16xf32>
    %6 = tpu.matmul %5, %0, %cst_8 {dimension_numbers = #tpu.dot_dimension_numbers<[0], [0], [1], [1], [0, 1, 1, 1], [], []>} : vector<4x16xf32>, vector<4x16xf32>, vector<16x16xf32> -> vector<16x16xf32>
    %7 = vector.broadcast %1 : vector<1x16xf32> to vector<16x16xf32>
    %8 = arith.addf %6, %7 : vector<16x16xf32>
    %cst_9 = arith.constant 0.000000e+00 : f32
    %9 = vector.broadcast %cst_9 : f32 to vector<16x16xf32>
    %10 = arith.maximumf %8, %9 : vector<16x16xf32>
    %11 = arith.truncf %10 : vector<16x16xf32> to vector<16x16xbf16>
    %cst_10 = arith.constant dense<0.000000e+00> : vector<16x32xf32>
    %12 = tpu.matmul %11, %2, %cst_10 {dimension_numbers = #tpu.dot_dimension_numbers<[1], [0], [0], [1], [0, 0, 1, 1], [], []>} : vector<16x16xbf16>, vector<16x32xbf16>, vector<16x32xf32> -> vector<16x32xf32>
    %13 = vector.shape_cast %12 : vector<16x32xf32> to vector<1x16x32xf32>
    %cst_11 = arith.constant dense<0xFF800000> : vector<1x32xf32>
    %14 = vector.multi_reduction <maximumf>, %13, %cst_11 [1] : vector<1x16x32xf32> to vector<1x32xf32>
    %15 = arith.maximumf %3, %14 : vector<1x32xf32>
    %16 = arith.truncf %12 : vector<16x32xf32> to vector<16x32xbf16>
    %17 = vector.shape_cast %16 : vector<16x32xbf16> to vector<1x16x32xbf16>
    %c0_12 = arith.constant 0 : index
    %c0_13 = arith.constant 0 : index
    %c0_14 = arith.constant 0 : index
    %18 = vector.load %arg11[%c0_12, %c0_13, %c0_14] : memref<1x16x32xbf16, #tpu.memory_space<vmem>>, vector<1x16x32xbf16>
    tpu.vector_store %arg11[%c0_12, %c0_13, %c0_14], %17 {strides = array<i32>} : memref<1x16x32xbf16, #tpu.memory_space<vmem>>, vector<1x16x32xbf16>,
    %19 = arith.truncf %15 : vector<1x32xf32> to vector<1x32xbf16>
    %c0_15 = arith.constant 0 : index
    %c0_16 = arith.constant 0 : index
    %20 = vector.load %arg6[%c0_15, %c0_16] : memref<32x32xbf16, #tpu.memory_space<vmem>>, vector<32x32xbf16>
    %cst_17 = arith.constant dense<0.000000e+00> : vector<1x32xf32>
    %21 = tpu.matmul %19, %20, %cst_17 {dimension_numbers = #tpu.dot_dimension_numbers<[1], [0], [0], [1], [0, 0, 1, 1], [], []>} : vector<1x32xbf16>, vector<32x32xbf16>, vector<1x32xf32> -> vector<1x32xf32>
    %c0_18 = arith.constant 0 : index
    %c0_19 = arith.constant 0 : index
    %22 = vector.load %arg7[%c0_18, %c0_19] : memref<1x32xf32, #tpu.memory_space<vmem>>, vector<1x32xf32>
    %23 = arith.addf %21, %22 : vector<1x32xf32>
    %c0_20 = arith.constant 0 : index
    %c0_21 = arith.constant 0 : index
    %24 = vector.load %arg5[%c0_20, %c0_21] : memref<32x32xbf16, #tpu.memory_space<vmem>>, vector<32x32xbf16>
    %c0_22 = arith.constant 0 : index
    %c0_23 = arith.constant 0 : index
    %25 = vector.load %arg8[%c0_22, %c0_23] : memref<32x128xbf16, #tpu.memory_space<vmem>>, vector<32x128xbf16>
    %cst_24 = arith.constant 0xFF800000 : f32
    %26 = vector.broadcast %cst_24 : f32 to vector<1x128xf32>
    %c0_25 = arith.constant 0 : index
    %c0_26 = arith.constant 0 : index
    %c0_27 = arith.constant 0 : index
    %27 = vector.load %arg11[%c0_25, %c0_26, %c0_27] : memref<1x16x32xbf16, #tpu.memory_space<vmem>>, vector<1x16x32xbf16>
    %28 = vector.shape_cast %27 : vector<1x16x32xbf16> to vector<16x32xbf16>
    %cst_28 = arith.constant dense<0.000000e+00> : vector<16x32xf32>
    %29 = tpu.matmul %28, %24, %cst_28 {dimension_numbers = #tpu.dot_dimension_numbers<[1], [0], [0], [1], [0, 0, 1, 1], [], []>} : vector<16x32xbf16>, vector<32x32xbf16>, vector<16x32xf32> -> vector<16x32xf32>
    %30 = vector.shape_cast %29 : vector<16x32xf32> to vector<1x16x32xf32>
    %31 = vector.shape_cast %23 : vector<1x32xf32> to vector<1x1x32xf32>
    %32 = vector.broadcast %31 : vector<1x1x32xf32> to vector<1x16x32xf32>
    %33 = arith.addf %30, %32 : vector<1x16x32xf32>
    %cst_29 = arith.constant 0.000000e+00 : f32
    %34 = vector.broadcast %cst_29 : f32 to vector<1x16x32xf32>
    %35 = arith.maximumf %33, %34 : vector<1x16x32xf32>
    %36 = arith.truncf %35 : vector<1x16x32xf32> to vector<1x16x32xbf16>
    %37 = vector.shape_cast %36 : vector<1x16x32xbf16> to vector<16x32xbf16>
    %cst_30 = arith.constant dense<0.000000e+00> : vector<16x128xf32>
    %38 = tpu.matmul %37, %25, %cst_30 {dimension_numbers = #tpu.dot_dimension_numbers<[1], [0], [0], [1], [0, 0, 1, 1], [], []>} : vector<16x32xbf16>, vector<32x128xbf16>, vector<16x128xf32> -> vector<16x128xf32>
    %39 = vector.shape_cast %38 : vector<16x128xf32> to vector<1x16x128xf32>
    %cst_31 = arith.constant dense<0xFF800000> : vector<1x128xf32>
    %40 = vector.multi_reduction <maximumf>, %39, %cst_31 [1] : vector<1x16x128xf32> to vector<1x128xf32>
    %41 = arith.maximumf %26, %40 : vector<1x128xf32>
    %c0_32 = arith.constant 0 : index
    %c0_33 = arith.constant 0 : index
    %42 = vector.load %arg9[%c0_32, %c0_33] : memref<1x128xf32, #tpu.memory_space<vmem>>, vector<1x128xf32>
    %43 = arith.addf %41, %42 : vector<1x128xf32>
    %c0_34 = arith.constant 0 : index
    %c0_35 = arith.constant 0 : index
    %c0_36 = arith.constant 0 : index
    %44 = vector.load %arg10[%c0_34, %c0_35, %c0_36] : memref<1x1x128xf32, #tpu.memory_space<vmem>>, vector<1x1x128xf32>
    %45 = vector.shape_cast %44 : vector<1x1x128xf32> to vector<1x128xf32>
    %46 = vector.shape_cast %43 : vector<1x128xf32> to vector<1x1x128xf32>
    tpu.vector_store %arg10[%c0_34, %c0_35, %c0_36], %46 {strides = array<i32>} : memref<1x1x128xf32, #tpu.memory_space<vmem>>, vector<1x1x128xf32>,
    return
  }
  func.func @transform_0(%arg0: i32) -> (i32, i32, i32) {
    %c0_i32 = arith.constant 0 : i32
    %c0_i32_0 = arith.constant 0 : i32
    %c0_i32_1 = arith.constant 0 : i32
    return %arg0, %c0_i32, %c0_i32_0 : i32, i32, i32
  }
  func.func @transform_1(%arg0: i32) -> (i32, i32) {
    %c0_i32 = arith.constant 0 : i32
    %c0_i32_0 = arith.constant 0 : i32
    %c0_i32_1 = arith.constant 0 : i32
    return %c0_i32, %c0_i32_0 : i32, i32
  }
  func.func @transform_2(%arg0: i32) -> (i32, i32) {
    %c0_i32 = arith.constant 0 : i32
    %c0_i32_0 = arith.constant 0 : i32
    %c0_i32_1 = arith.constant 0 : i32
    return %c0_i32, %c0_i32_0 : i32, i32
  }
  func.func @transform_3(%arg0: i32) -> (i32, i32) {
    %c0_i32 = arith.constant 0 : i32
    %c0_i32_0 = arith.constant 0 : i32
    %c0_i32_1 = arith.constant 0 : i32
    return %c0_i32, %c0_i32_0 : i32, i32
  }
  func.func @transform_4(%arg0: i32) -> (i32, i32) {
    %c0_i32 = arith.constant 0 : i32
    %c0_i32_0 = arith.constant 0 : i32
    %c0_i32_1 = arith.constant 0 : i32
    return %c0_i32, %c0_i32_0 : i32, i32
  }
  func.func @transform_5(%arg0: i32) -> (i32, i32) {
    %c0_i32 = arith.constant 0 : i32
    %c0_i32_0 = arith.constant 0 : i32
    %c0_i32_1 = arith.constant 0 : i32
    return %c0_i32, %c0_i32_0 : i32, i32
  }
  func.func @transform_6(%arg0: i32) -> (i32, i32) {
    %c0_i32 = arith.constant 0 : i32
    %c0_i32_0 = arith.constant 0 : i32
    %c0_i32_1 = arith.constant 0 : i32
    return %c0_i32, %c0_i32_0 : i32, i32
  }
  func.func @transform_7(%arg0: i32) -> (i32, i32) {
    %c0_i32 = arith.constant 0 : i32
    %c0_i32_0 = arith.constant 0 : i32
    %c0_i32_1 = arith.constant 0 : i32
    return %c0_i32, %c0_i32_0 : i32, i32
  }
  func.func @transform_8(%arg0: i32) -> (i32, i32) {
    %c0_i32 = arith.constant 0 : i32
    %c0_i32_0 = arith.constant 0 : i32
    %c0_i32_1 = arith.constant 0 : i32
    return %c0_i32, %c0_i32_0 : i32, i32
  }
  func.func @transform_9(%arg0: i32) -> (i32, i32, i32) {
    %c0_i32 = arith.constant 0 : i32
    %c0_i32_0 = arith.constant 0 : i32
    %c0_i32_1 = arith.constant 0 : i32
    return %arg0, %c0_i32, %c0_i32_0 : i32, i32, i32
  }
}

</mosaic_0001>

<llo_original>
// kernel: tpu_custom_call.1
$region0: #{tpu_custom_call.1}
  #allocation0 [shape = 'u32[]', space=smem, size = 0x4, offset = 0x4, fixed_abs, tag = 'smem constant byte address 0x4 - core index']
  #allocation1 [shape = 'u32[144,128]{1,0:T(1,128)}', space=vmem, size = 0x12000, scoped, tag = 'internal scratch']
  #allocation2 [shape = 'bf16[1,16,32]{2,1,0:T(16,128)(2,1)}', space=vmem, size = 0x1000, scoped, tag = 'scratch operand']
  %s0 = inlined_call_operand.hbm [shape: f32[2,4,16], index: 0, kind: input, shape index: {}]
  %s1 = inlined_call_operand.hbm [shape: f32[4,16], index: 1, kind: input, shape index: {}]
  %s2 = inlined_call_operand.vmem [shape: f32[1,16], index: 2, kind: input, shape index: {}]
  %s3 = inlined_call_operand.hbm [shape: bf16[16,32], index: 3, kind: input, shape index: {}]
  %s4 = inlined_call_operand.hbm [shape: bf16[32,32], index: 4, kind: input, shape index: {}]
  %s5 = inlined_call_operand.vmem [shape: bf16[32,32], index: 5, kind: input, shape index: {}]
  %s6 = inlined_call_operand.vmem [shape: f32[1,32], index: 6, kind: input, shape index: {}]
  %s7 = inlined_call_operand.hbm [shape: bf16[32,128], index: 7, kind: input, shape index: {}]
  %s8 = inlined_call_operand.vmem [shape: f32[1,128], index: 8, kind: input, shape index: {}]
  %s9 = inlined_call_operand.hbm [shape: f32[2,1,128], index: 9, kind: output, shape index: {}]
  %s10 = sld [smem:[#allocation0]]
  $region89: #{tpu_custom_call.1} parent=0
    _
  %s12 = ssub.s32 1, %s10
  %s13 = scalar_select 0, %s12, %s10
  $region1: #{tpu_custom_call.1} parent=0
    #allocation3 [shape = 'u8[4096]{0}', space=vmem, size = 0x1000, scoped, tag = 'input window, operand 0']
    #allocation4 [shape = 's32[2]{0}', space=sflag, size = 0x8, scoped, tag = 'scoped memory for tpu_custom_call.1']
    #allocation5 [shape = 's32[2]{0}', space=sflag, size = 0x8, scoped, tag = 'scoped memory for tpu_custom_call.1']
    #allocation6 [shape = 'u8[2048]{0}', space=vmem, size = 0x800, scoped, tag = 'input window, operand 1, single buffered']
    #allocation7 [shape = 's32[1]{0}', space=sflag, size = 0x4, scoped, tag = 'scoped memory for tpu_custom_call.1']
    #allocation8 [shape = 'u8[4096]{0}', space=vmem, size = 0x1000, scoped, tag = 'input window, operand 3, single buffered']
    #allocation9 [shape = 'u8[8192]{0}', space=vmem, size = 0x2000, scoped, tag = 'input window, operand 4, single buffered']
    #allocation10 [shape = 's32[1]{0}', space=sflag, size = 0x4, scoped, tag = 'scoped memory for tpu_custom_call.1']
    #allocation11 [shape = 'u8[8192]{0}', space=vmem, size = 0x2000, scoped, tag = 'input window, operand 7, single buffered']
    #allocation12 [shape = 'u8[1024]{0}', space=vmem, size = 0x400, scoped, tag = 'output window, operand 0']
    %14 = vsyncpa [#allocation4], 0
    %s15 = scalar_lea.sflag [#allocation4], 1
    %16 = vsyncpa %s15, 0
    %17 = vsyncpa [#allocation7], 0
    %18 = vsyncpa [#allocation10], 0
    %19 = vsyncpa [#allocation5], 0
    %s20 = scalar_lea.sflag [#allocation5], 1
    %21 = vsyncpa %s20, 0
    loop: start=0, step=1, limit=4
    $region2: #{tpu_custom_call.1} parent=1 // loop_pre_header
      _
    $region3: #{tpu_custom_call.1} parent=1 // loop_header
      %s23 = sphi 0, %s27
      %p24 = scmp.ge.s32.totalorder %s23, 4
      %s33 = sphi 0, %s35
      %s36 = sphi 0, %s33
      %s37 = sphi 0, %s36
      %s53 = sphi 0, %s37
      %s57 = sphi 0, %s57
      %s59 = sphi 0, %s57
      %s60 = sphi 0, %s59
      %s74 = sphi 0, %s60
      %s78 = sphi 0, %s78
      %s80 = sphi 0, %s78
      %s81 = sphi 0, %s80
      %s95 = sphi 0, %s81
      %s99 = sphi 0, %s99
      %s101 = sphi 0, %s99
      %s102 = sphi 0, %s101
      %s116 = sphi 0, %s102
      %s120 = sphi 0, %s120
      %s122 = sphi 0, %s120
      %s123 = sphi 0, %s122
      %s137 = sphi 0, %s123
      %s141 = sphi 0, %s141
      %s143 = sphi 0, %s141
      %s144 = sphi 0, %s143
      %s158 = sphi 0, %s144
      %s162 = sphi 0, %s162
      %s164 = sphi 0, %s162
      %s165 = sphi 0, %s164
      %s179 = sphi 0, %s165
      %s183 = sphi 0, %s183
      %s185 = sphi 0, %s183
      %s186 = sphi 0, %s185
      %s200 = sphi 0, %s186
      %s204 = sphi 0, %s204
      %s206 = sphi 0, %s204
      %s207 = sphi 0, %s206
      %s221 = sphi 0, %s207
      %s227 = sphi 0, %s229
      %s230 = sphi 0, %s227
      %s231 = sphi 0, %s230
      %s247 = sphi 0, %s231
    $region4: #{tpu_custom_call.1} parent=1 // loop_header_branch
      %26 = sbr.rel (%p24) target = $region8
    $region5: #{tpu_custom_call.1} parent=1 // loop_body
      %s28 = ssub.s32 %s23, 1
      %s29 = ssub.s32 %s23, 2
      %s30 = sadd.s32 %s23, 1
      %s31 = ssub.s32 %s23, %s30
      %p32 = scmp.eq.s32.totalorder %s31, 0
      %s34 = sadd.s32 %s33, 1
      %s35 = scalar_select %p32, %s33, %s34
      %p38 = pneg %p32
      %p39 = scmp.eq.s32.totalorder %s23, 1
      %p40 = por %p38, %p39
      %p41 = scmp.ne.s32.totalorder %s33, %s36
      %p42 = scmp.eq.s32.totalorder %s23, 0
      %p43 = por %p41, %p42
      %p44 = scmp.ne.s32.totalorder %s33, %s36
      %p45 = scmp.eq.s32.totalorder %s28, 1
      %p46 = por %p44, %p45
      %p47 = scmp.ne.s32.totalorder %s36, %s37
      %p48 = scmp.eq.s32.totalorder %s28, 0
      %p49 = por %p47, %p48
      %p50 = scmp.ne.s32.totalorder %s36, %s37
      %p51 = scmp.eq.s32.totalorder %s29, 1
      %p52 = por %p50, %p51
      %p54 = scmp.ne.s32.totalorder %s37, %s53
      %p55 = scmp.eq.s32.totalorder %s29, 0
      %p56 = por %p54, %p55
      %s58 = sadd.s32 %s57, 1
      %p61 = scmp.eq.s32.totalorder %s23, 1
      %p62 = scmp.ne.s32.totalorder %s57, %s59
      %p63 = scmp.eq.s32.totalorder %s23, 0
      %p64 = por %p62, %p63
      %p65 = scmp.ne.s32.totalorder %s57, %s59
      %p66 = scmp.eq.s32.totalorder %s28, 1
      %p67 = por %p65, %p66
      %p68 = scmp.ne.s32.totalorder %s59, %s60
      %p69 = scmp.eq.s32.totalorder %s28, 0
      %p70 = por %p68, %p69
      %p71 = scmp.ne.s32.totalorder %s59, %s60
      %p72 = scmp.eq.s32.totalorder %s29, 1
      %p73 = por %p71, %p72
      %p75 = scmp.ne.s32.totalorder %s60, %s74
      %p76 = scmp.eq.s32.totalorder %s29, 0
      %p77 = por %p75, %p76
      %s79 = sadd.s32 %s78, 1
      %p82 = scmp.eq.s32.totalorder %s23, 1
      %p83 = scmp.ne.s32.totalorder %s78, %s80
      %p84 = scmp.eq.s32.totalorder %s23, 0
      %p85 = por %p83, %p84
      %p86 = scmp.ne.s32.totalorder %s78, %s80
      %p87 = scmp.eq.s32.totalorder %s28, 1
      %p88 = por %p86, %p87
      %p89 = scmp.ne.s32.totalorder %s80, %s81
      %p90 = scmp.eq.s32.totalorder %s28, 0
      %p91 = por %p89, %p90
      %p92 = scmp.ne.s32.totalorder %s80, %s81
      %p93 = scmp.eq.s32.totalorder %s29, 1
      %p94 = por %p92, %p93
      %p96 = scmp.ne.s32.totalorder %s81, %s95
      %p97 = scmp.eq.s32.totalorder %s29, 0
      %p98 = por %p96, %p97
      %s100 = sadd.s32 %s99, 1
      %p103 = scmp.eq.s32.totalorder %s23, 1
      %p104 = scmp.ne.s32.totalorder %s99, %s101
      %p105 = scmp.eq.s32.totalorder %s23, 0
      %p106 = por %p104, %p105
      %p107 = scmp.ne.s32.totalorder %s99, %s101
      %p108 = scmp.eq.s32.totalorder %s28, 1
      %p109 = por %p107, %p108
      %p110 = scmp.ne.s32.totalorder %s101, %s102
      %p111 = scmp.eq.s32.totalorder %s28, 0
      %p112 = por %p110, %p111
      %p113 = scmp.ne.s32.totalorder %s101, %s102
      %p114 = scmp.eq.s32.totalorder %s29, 1
      %p115 = por %p113, %p114
      %p117 = scmp.ne.s32.totalorder %s102, %s116
      %p118 = scmp.eq.s32.totalorder %s29, 0
      %p119 = por %p117, %p118
      %s121 = sadd.s32 %s120, 1
      %p124 = scmp.eq.s32.totalorder %s23, 1
      %p125 = scmp.ne.s32.totalorder %s120, %s122
      %p126 = scmp.eq.s32.totalorder %s23, 0
      %p127 = por %p125, %p126
      %p128 = scmp.ne.s32.totalorder %s120, %s122
      %p129 = scmp.eq.s32.totalorder %s28, 1
      %p130 = por %p128, %p129
      %p131 = scmp.ne.s32.totalorder %s122, %s123
      %p132 = scmp.eq.s32.totalorder %s28, 0
      %p133 = por %p131, %p132
      %p134 = scmp.ne.s32.totalorder %s122, %s123
      %p135 = scmp.eq.s32.totalorder %s29, 1
      %p136 = por %p134, %p135
      %p138 = scmp.ne.s32.totalorder %s123, %s137
      %p139 = scmp.eq.s32.totalorder %s29, 0
      %p140 = por %p138, %p139
      %s142 = sadd.s32 %s141, 1
      %p145 = scmp.eq.s32.totalorder %s23, 1
      %p146 = scmp.ne.s32.totalorder %s141, %s143
      %p147 = scmp.eq.s32.totalorder %s23, 0
      %p148 = por %p146, %p147
      %p149 = scmp.ne.s32.totalorder %s141, %s143
      %p150 = scmp.eq.s32.totalorder %s28, 1
      %p151 = por %p149, %p150
      %p152 = scmp.ne.s32.totalorder %s143, %s144
      %p153 = scmp.eq.s32.totalorder %s28, 0
      %p154 = por %p152, %p153
      %p155 = scmp.ne.s32.totalorder %s143, %s144
      %p156 = scmp.eq.s32.totalorder %s29, 1
      %p157 = por %p155, %p156
      %p159 = scmp.ne.s32.totalorder %s144, %s158
      %p160 = scmp.eq.s32.totalorder %s29, 0
      %p161 = por %p159, %p160
      %s163 = sadd.s32 %s162, 1
      %p166 = scmp.eq.s32.totalorder %s23, 1
      %p167 = scmp.ne.s32.totalorder %s162, %s164
      %p168 = scmp.eq.s32.totalorder %s23, 0
      %p169 = por %p167, %p168
      %p170 = scmp.ne.s32.totalorder %s162, %s164
      %p171 = scmp.eq.s32.totalorder %s28, 1
      %p172 = por %p170, %p171
      %p173 = scmp.ne.s32.totalorder %s164, %s165
      %p174 = scmp.eq.s32.totalorder %s28, 0
      %p175 = por %p173, %p174
      %p176 = scmp.ne.s32.totalorder %s164, %s165
      %p177 = scmp.eq.s32.totalorder %s29, 1
      %p178 = por %p176, %p177
      %p180 = scmp.ne.s32.totalorder %s165, %s179
      %p181 = scmp.eq.s32.totalorder %s29, 0
      %p182 = por %p180, %p181
      %s184 = sadd.s32 %s183, 1
      %p187 = scmp.eq.s32.totalorder %s23, 1
      %p188 = scmp.ne.s32.totalorder %s183, %s185
      %p189 = scmp.eq.s32.totalorder %s23, 0
      %p190 = por %p188, %p189
      %p191 = scmp.ne.s32.totalorder %s183, %s185
      %p192 = scmp.eq.s32.totalorder %s28, 1
      %p193 = por %p191, %p192
      %p194 = scmp.ne.s32.totalorder %s185, %s186
      %p195 = scmp.eq.s32.totalorder %s28, 0
      %p196 = por %p194, %p195
      %p197 = scmp.ne.s32.totalorder %s185, %s186
      %p198 = scmp.eq.s32.totalorder %s29, 1
      %p199 = por %p197, %p198
      %p201 = scmp.ne.s32.totalorder %s186, %s200
      %p202 = scmp.eq.s32.totalorder %s29, 0
      %p203 = por %p201, %p202
      %s205 = sadd.s32 %s204, 1
      %p208 = scmp.eq.s32.totalorder %s23, 1
      %p209 = scmp.ne.s32.totalorder %s204, %s206
      %p210 = scmp.eq.s32.totalorder %s23, 0
      %p211 = por %p209, %p210
      %p212 = scmp.ne.s32.totalorder %s204, %s206
      %p213 = scmp.eq.s32.totalorder %s28, 1
      %p214 = por %p212, %p213
      %p215 = scmp.ne.s32.totalorder %s206, %s207
      %p216 = scmp.eq.s32.totalorder %s28, 0
      %p217 = por %p215, %p216
      %p218 = scmp.ne.s32.totalorder %s206, %s207
      %p219 = scmp.eq.s32.totalorder %s29, 1
      %p220 = por %p218, %p219
      %p222 = scmp.ne.s32.totalorder %s207, %s221
      %p223 = scmp.eq.s32.totalorder %s29, 0
      %p224 = por %p222, %p223
      %s225 = ssub.s32 %s23, %s30
      %p226 = scmp.eq.s32.totalorder %s225, 0
      %s228 = sadd.s32 %s227, 1
      %s229 = scalar_select %p226, %s227, %s228
      %p232 = pneg %p226
      %p233 = scmp.eq.s32.totalorder %s23, 1
      %p234 = por %p232, %p233
      %p235 = scmp.ne.s32.totalorder %s227, %s230
      %p236 = scmp.eq.s32.totalorder %s23, 0
      %p237 = por %p235, %p236
      %p238 = scmp.ne.s32.totalorder %s227, %s230
      %p239 = scmp.eq.s32.totalorder %s28, 1
      %p240 = por %p238, %p239
      %p241 = scmp.ne.s32.totalorder %s230, %s231
      %p242 = scmp.eq.s32.totalorder %s28, 0
      %p243 = por %p241, %p242
      %p244 = scmp.ne.s32.totalorder %s230, %s231
      %p245 = scmp.eq.s32.totalorder %s29, 1
      %p246 = por %p244, %p245
      %p248 = scmp.ne.s32.totalorder %s231, %s247
      %p249 = scmp.eq.s32.totalorder %s29, 0
      %p250 = por %p248, %p249
      %p251 = scmp.le.s32.totalorder 1, %s23
      %p252 = scmp.lt.s32.totalorder %s23, 3
      %p253 = pnand %p251, %p252
      %p254 = pneg %p253
      // Predicated region
      $region9: #{tpu_custom_call.1} parent=5 // pred_check
        _
      $region10: #{tpu_custom_call.1} parent=5 // pred_check_branch
        %256 = sbr.rel (%p253) target = $region12
      $region11: #{tpu_custom_call.1} parent=5 // pred_region
        %s257 = ssub.s32 %s23, 1
        // Predicated region
        $region13: #{tpu_custom_call.1} parent=11 // pred_check
          %p258 = pneg %p70
        $region14: #{tpu_custom_call.1} parent=11 // pred_check_branch
          %260 = sbr.rel (%p258) target = $region16
        $region15: #{tpu_custom_call.1} parent=11 // pred_region
          %s262 = ssub.s32 64, 64
          %263 = vsyncadd [#allocation7], %s262
          %s265 = sshll.u32 [#allocation6], 4
          %s266 = int_to_ptr.vmem [resolvable:$true] %s265
          %268 = dma.hbm_to_vmem [thread:$0]  %s1, 64, %s266, [#allocation7]
        $region16: #{tpu_custom_call.1} parent=11 // pred_fallthru
          _
        // Predicated region
        $region17: #{tpu_custom_call.1} parent=11 // pred_check
          %p269 = pneg %p91
        $region18: #{tpu_custom_call.1} parent=11 // pred_check_branch
          %271 = sbr.rel (%p269) target = $region20
        $region19: #{tpu_custom_call.1} parent=11 // pred_region
          _
        $region20: #{tpu_custom_call.1} parent=11 // pred_fallthru
          _
        // Predicated region
        $region21: #{tpu_custom_call.1} parent=11 // pred_check
          %p272 = pneg %p112
        $region22: #{tpu_custom_call.1} parent=11 // pred_check_branch
          %274 = sbr.rel (%p272) target = $region24
        $region23: #{tpu_custom_call.1} parent=11 // pred_region
          %s276 = ssub.s32 128, 128
          %277 = vsyncadd [#allocation7], %s276
          %s278 = sshll.u32 [#allocation8], 4
          %s279 = int_to_ptr.vmem [resolvable:$true] %s278
          %284 = dma.hbm_to_vmem [thread:$0]  %s3, 128, %s279, [#allocation7], 64, 64, 4
        $region24: #{tpu_custom_call.1} parent=11 // pred_fallthru
          _
        // Predicated region
        $region25: #{tpu_custom_call.1} parent=11 // pred_check
          %p285 = pneg %p133
        $region26: #{tpu_custom_call.1} parent=11 // pred_check_branch
          %287 = sbr.rel (%p285) target = $region28
        $region27: #{tpu_custom_call.1} parent=11 // pred_region
          %s289 = ssub.s32 256, 256
          %290 = vsyncadd [#allocation10], %s289
          %s291 = sshll.u32 [#allocation9], 4
          %s292 = int_to_ptr.vmem [resolvable:$true] %s291
          %297 = dma.hbm_to_vmem [thread:$0]  %s4, 256, %s292, [#allocation10], 64, 64, 4
        $region28: #{tpu_custom_call.1} parent=11 // pred_fallthru
          _
        // Predicated region
        $region29: #{tpu_custom_call.1} parent=11 // pred_check
          %p298 = pneg %p154
        $region30: #{tpu_custom_call.1} parent=11 // pred_check_branch
          %300 = sbr.rel (%p298) target = $region32
        $region31: #{tpu_custom_call.1} parent=11 // pred_region
          _
        $region32: #{tpu_custom_call.1} parent=11 // pred_fallthru
          _
        // Predicated region
        $region33: #{tpu_custom_call.1} parent=11 // pred_check
          %p301 = pneg %p175
        $region34: #{tpu_custom_call.1} parent=11 // pred_check_branch
          %303 = sbr.rel (%p301) target = $region36
        $region35: #{tpu_custom_call.1} parent=11 // pred_region
          _
        $region36: #{tpu_custom_call.1} parent=11 // pred_fallthru
          _
        // Predicated region
        $region37: #{tpu_custom_call.1} parent=11 // pred_check
          %p304 = pneg %p196
        $region38: #{tpu_custom_call.1} parent=11 // pred_check_branch
          %306 = sbr.rel (%p304) target = $region40
        $region39: #{tpu_custom_call.1} parent=11 // pred_region
          %s308 = ssub.s32 256, 256
          %309 = vsyncadd [#allocation10], %s308
          %s310 = sshll.u32 [#allocation11], 4
          %s311 = int_to_ptr.vmem [resolvable:$true] %s310
          %316 = dma.hbm_to_vmem [thread:$0]  %s7, 256, %s311, [#allocation10], 64, 64, 4
        $region40: #{tpu_custom_call.1} parent=11 // pred_fallthru
          _
        // Predicated region
        $region41: #{tpu_custom_call.1} parent=11 // pred_check
          %p317 = pneg %p217
        $region42: #{tpu_custom_call.1} parent=11 // pred_check_branch
          %319 = sbr.rel (%p317) target = $region44
        $region43: #{tpu_custom_call.1} parent=11 // pred_region
          _
        $region44: #{tpu_custom_call.1} parent=11 // pred_fallthru
          _
      $region12: #{tpu_custom_call.1} parent=5 // pred_fallthru
        _
      %p320 = scmp.lt.s32.totalorder %s23, 2
      // Predicated region
      $region45: #{tpu_custom_call.1} parent=5 // pred_check
        %p321 = pneg %p320
      $region46: #{tpu_custom_call.1} parent=5 // pred_check_branch
        %323 = sbr.rel (%p321) target = $region48
      $region47: #{tpu_custom_call.1} parent=5 // pred_region
        // Predicated region
        $region49: #{tpu_custom_call.1} parent=47 // pred_check
          %p324 = pneg %p43
        $region50: #{tpu_custom_call.1} parent=47 // pred_check_branch
          %326 = sbr.rel (%p324) target = $region52
        $region51: #{tpu_custom_call.1} parent=47 // pred_region
          %s327 = sand.u32 %s33, 1
          %s328 = scalar_lea.sflag [#allocation4], %s327
          %s329 = sand.u32 %s33, 1
          %s330 = smul.addr %s329, 4
          %s331 = scalar_lea.vmem [#allocation3], %s330
          %s333 = ssub.s32 64, 64
          %334 = vsyncadd %s328, %s333
          %s335 = smul.addr %s23, 64
          %s336 = scalar_lea.hbm %s0, %s335
          %s338 = sshll.u32 %s331, 4
          %s339 = int_to_ptr.vmem [resolvable:$true] %s338
          %341 = dma.hbm_to_vmem [thread:$0]  %s336, 64, %s339, %s328
        $region52: #{tpu_custom_call.1} parent=47 // pred_fallthru
          _
      $region48: #{tpu_custom_call.1} parent=5 // pred_fallthru
        _
      %p342 = scmp.le.s32.totalorder 1, %s23
      %p343 = scmp.lt.s32.totalorder %s23, 3
      %p344 = pnand %p342, %p343
      %p345 = pneg %p344
      // Predicated region
      $region53: #{tpu_custom_call.1} parent=5 // pred_check
        _
      $region54: #{tpu_custom_call.1} parent=5 // pred_check_branch
        %347 = sbr.rel (%p344) target = $region56
      $region55: #{tpu_custom_call.1} parent=5 // pred_region
        %s348 = ssub.s32 %s23, 1
        %s349 = sand.u32 %s36, 1
        %s350 = scalar_lea.sflag [#allocation4], %s349
        %s351 = sand.u32 %s36, 1
        %s352 = smul.addr %s351, 4
        %s353 = scalar_lea.vmem [#allocation3], %s352
        // Predicated region
        $region57: #{tpu_custom_call.1} parent=55 // pred_check
          %p354 = pneg %p49
        $region58: #{tpu_custom_call.1} parent=55 // pred_check_branch
          %356 = sbr.rel (%p354) target = $region60
        $region59: #{tpu_custom_call.1} parent=55 // pred_region
          %357 = dma.done %s350, 64
        $region60: #{tpu_custom_call.1} parent=55 // pred_fallthru
          _
        // Predicated region
        $region61: #{tpu_custom_call.1} parent=55 // pred_check
          %p358 = pneg %p70
        $region62: #{tpu_custom_call.1} parent=55 // pred_check_branch
          %360 = sbr.rel (%p358) target = $region64
        $region63: #{tpu_custom_call.1} parent=55 // pred_region
          %361 = dma.done [#allocation7], 64
        $region64: #{tpu_custom_call.1} parent=55 // pred_fallthru
          _
        // Predicated region
        $region65: #{tpu_custom_call.1} parent=55 // pred_check
          %p362 = pneg %p112
        $region66: #{tpu_custom_call.1} parent=55 // pred_check_branch
          %364 = sbr.rel (%p362) target = $region68
        $region67: #{tpu_custom_call.1} parent=55 // pred_region
          %365 = dma.done [#allocation7], 128
        $region68: #{tpu_custom_call.1} parent=55 // pred_fallthru
          _
        // Predicated region
        $region69: #{tpu_custom_call.1} parent=55 // pred_check
          %p366 = pneg %p133
        $region70: #{tpu_custom_call.1} parent=55 // pred_check_branch
          %368 = sbr.rel (%p366) target = $region72
        $region71: #{tpu_custom_call.1} parent=55 // pred_region
          %369 = dma.done [#allocation10], 256
        $region72: #{tpu_custom_call.1} parent=55 // pred_fallthru
          _
        // Predicated region
        $region73: #{tpu_custom_call.1} parent=55 // pred_check
          %p370 = pneg %p196
        $region74: #{tpu_custom_call.1} parent=55 // pred_check_branch
          %372 = sbr.rel (%p370) target = $region76
        $region75: #{tpu_custom_call.1} parent=55 // pred_region
          %373 = dma.done [#allocation10], 256
        $region76: #{tpu_custom_call.1} parent=55 // pred_fallthru
          _
        %s374 = sand.u32 %s36, 1
        %s375 = scalar_lea.sflag [#allocation4], %s374
        %s376 = sand.u32 %s36, 1
        %s377 = smul.addr %s376, 4
        %s378 = scalar_lea.vmem [#allocation3], %s377
        %p379 = pneg %p49
        %p380 = pneg %p46
        %p381 = pneg %p70
        %p382 = pneg %p67
        %p383 = pneg %p91
        %p384 = pneg %p88
        %p385 = pneg %p112
        %p386 = pneg %p109
        %p387 = pneg %p133
        %p388 = pneg %p130
        %p389 = pneg %p154
        %p390 = pneg %p151
        %p391 = pneg %p175
        %p392 = pneg %p172
        %p393 = pneg %p196
        %p394 = pneg %p193
        %p395 = pneg %p217
        %p396 = pneg %p214
        %p397 = pneg %p243
        %p398 = pneg %p240
        %s399 = sand.u32 %s230, 1
        %s400 = scalar_lea.sflag [#allocation5], %s399
        %s401 = sand.u32 %s230, 1
        %s402 = scalar_lea.vmem [#allocation12], %s401
        %v404 = vld [vmem:[#allocation6] sm:$0xf]
        %v405 = vld [vmem:[%s2] sm:$0x1]
        %v406 = vld [vmem:[#allocation8] sm:$0xf]
        %v407 = vld [vmem:[#allocation8 + $0x4] sm:$0xf]
        %v408 = vld [vmem:[%s353] sm:$0xf]
        %v410 = vlaneseq
        %v411 = vshrl.u32 %v410, 7
        %v412 = vsub.s32 0, %v411
        %v413 = vrot.slane %v405, %v412
        %415 = vxpose.xlu0.b32.start [1/16] %v408, 128
        %416 = vxpose.xlu0.b32.cont [2/16] 0.0, 128
        %417 = vxpose.xlu0.b32.cont [3/16] 0.0, 128
        %418 = vxpose.xlu0.b32.cont [4/16] 0.0, 128
        %419 = vxpose.xlu0.b32.cont [5/16] 0.0, 128
        %420 = vxpose.xlu0.b32.cont [6/16] 0.0, 128
        %421 = vxpose.xlu0.b32.cont [7/16] 0.0, 128
        %422 = vxpose.xlu0.b32.cont [8/16] 0.0, 128
        %423 = vxpose.xlu0.b32.cont [9/16] 0.0, 128
        %424 = vxpose.xlu0.b32.cont [10/16] 0.0, 128
        %425 = vxpose.xlu0.b32.cont [11/16] 0.0, 128
        %426 = vxpose.xlu0.b32.cont [12/16] 0.0, 128
        %427 = vxpose.xlu0.b32.cont [13/16] 0.0, 128
        %428 = vxpose.xlu0.b32.cont [14/16] 0.0, 128
        %429 = vxpose.xlu0.b32.cont [15/16] 0.0, 128
        %430 = vxpose.xlu0.b32.end [16/16] 0.0, 128
        %v431 = vpop.trf.xlu0
        %v432 = vpop.trf.xlu0
        %v433 = vpop.trf.xlu0
        %v434 = vpop.trf.xlu0
        %v435 = vpop.trf.xlu0
        %v436 = vpop.trf.xlu0
        %v437 = vpop.trf.xlu0
        %v438 = vpop.trf.xlu0
        %v439 = vpop.trf.xlu0
        %v440 = vpop.trf.xlu0
        %v441 = vpop.trf.xlu0
        %v442 = vpop.trf.xlu0
        %v443 = vpop.trf.xlu0
        %v444 = vpop.trf.xlu0
        %v445 = vpop.trf.xlu0
        %v446 = vpop.trf.xlu0
        %vm447 = vcmask 31744
        %v449 = vsel %vm447, %v431, 0
        %v452 = vsel %vm447, %v432, 0
        %vm454 = vcmask 1043456
        %v456 = vsel %vm454, %v404, 0
        %458 = vmatprep.subr.mxu0 0.0
        %459 = vmatpush1.msra.mxu0 %v456
        %460 = vmatprep.subr.mxu0 0.0
        %461 = vmatpush1.msra.mxu0 0.0
        %462 = vmatprep.subr.mxu0 0.0
        %463 = vmatpush1.msra.mxu0 0.0
        %464 = vmatprep.subr.mxu0 0.0
        %465 = vmatpush1.msra.mxu0 0.0
        %466 = vmatprep.subr.mxu0 0.0
        %467 = vmatpush1.msra.mxu0 0.0
        %468 = vmatprep.subr.mxu0 0.0
        %469 = vmatpush1.msra.mxu0 0.0
        %470 = vmatprep.subr.mxu0 0.0
        %471 = vmatpush1.msra.mxu0 0.0
        %472 = vmatprep.subr.mxu0 0.0
        %473 = vmatpush1.msra.mxu0 0.0
        %474 = vmatprep.subr.mxu0 0.0
        %475 = vmatpush1.msra.mxu0 0.0
        %476 = vmatprep.subr.mxu0 0.0
        %477 = vmatpush1.msra.mxu0 0.0
        %478 = vmatprep.subr.mxu0 0.0
        %479 = vmatpush1.msra.mxu0 0.0
        %480 = vmatprep.subr.mxu0 0.0
        %481 = vmatpush1.msra.mxu0 0.0
        %482 = vmatprep.subr.mxu0 0.0
        %483 = vmatpush1.msra.mxu0 0.0
        %484 = vmatprep.subr.mxu0 0.0
        %485 = vmatpush1.msra.mxu0 0.0
        %486 = vmatprep.subr.mxu0 0.0
        %487 = vmatpush1.msra.mxu0 0.0
        %488 = vmatprep.subr.mxu0 0.0
        %489 = vmatpush1.msra.mxu0 0.0
        %490 = vmatprep.subr.mxu0 0.0
        %491 = vmatpush1.msra.mxu0 0.0
        %492 = vmatprep.subr.mxu0 0.0
        %493 = vmatpush1.msra.mxu0 0.0
        %494 = vmatprep.subr.mxu0 0.0
        %495 = vmatpush1.msra.mxu0 0.0
        %496 = vmatprep.subr.mxu0 0.0
        %497 = vmatpush1.msra.mxu0 0.0
        %498 = vmatprep.subr.mxu0 0.0
        %499 = vmatpush1.msra.mxu0 0.0
        %500 = vmatprep.subr.mxu0 0.0
        %501 = vmatpush1.msra.mxu0 0.0
        %502 = vmatprep.subr.mxu0 0.0
        %503 = vmatpush1.msra.mxu0 0.0
        %504 = vmatprep.subr.mxu0 0.0
        %505 = vmatpush1.msra.mxu0 0.0
        %506 = vmatprep.subr.mxu0 0.0
        %507 = vmatpush1.msra.mxu0 0.0
        %508 = vmatprep.subr.mxu0 0.0
        %509 = vmatpush1.msra.mxu0 0.0
        %510 = vmatprep.subr.mxu0 0.0
        %511 = vmatpush1.msra.mxu0 0.0
        %512 = vmatprep.subr.mxu0 0.0
        %513 = vmatpush1.msra.mxu0 0.0
        %514 = vmatprep.subr.mxu0 0.0
        %515 = vmatpush1.msra.mxu0 0.0
        %516 = vmatprep.subr.mxu0 0.0
        %517 = vmatpush1.msra.mxu0 0.0
        %518 = vmatprep.subr.mxu0 0.0
        %519 = vmatpush1.msra.mxu0 0.0
        %520 = vmatprep.subr.mxu0 0.0
        %521 = vmatpush1.msra.mxu0 0.0
        %522 = vmatprep.mubr.f32.mxu0 0.0
        %523 = vmatmul.mubr.f32.gmra.mrb[0].mxu0 %v449
        %v524 = vpop.f32.mrb[0].mxu0
        %v525 = vadd.f32 %v413, %v524
        %v526 = vpop.f32.mrb[0].mxu0
        %527 = vmatprep.mubr.f32.mxu0 0.0
        %528 = vmatmul.mubr.f32.gmra.mrb[0].mxu0 %v452
        %v529 = vpop.f32.mrb[0].mxu0
        %v530 = vadd.f32 %v413, %v529
        %v531 = vpop.f32.mrb[0].mxu0
        %532 = vdwg.mxu0
        %v533 = vmax.f32 %v525, 0.0
        %v534 = vmax.f32 %v530, 0.0
        %v535 = vpack.c.bf16 %v534, %v533
        %v538 = vunpack.c.l.b16 %v406
        %v539 = vunpack.c.l.b16 %v407
        %v540 = vpack.c.b16 %v539, %v538
        %vm542 = vcmask 130048
        %v544 = vsel %vm542, %v535, 0
        %546 = vmatprep.subr.bf16.mxu0 0
        %547 = vmatpush1.bf16.msra.mxu0 %v540
        %548 = vmatprep.subr.bf16.mxu0 0
        %549 = vmatpush1.bf16.msra.mxu0 0
        %550 = vmatprep.subr.bf16.mxu0 0
        %551 = vmatpush1.bf16.msra.mxu0 0
        %552 = vmatprep.subr.bf16.mxu0 0
        %553 = vmatpush1.bf16.msra.mxu0 0
        %554 = vmatprep.subr.bf16.mxu0 0
        %555 = vmatpush1.bf16.msra.mxu0 0
        %556 = vmatprep.subr.bf16.mxu0 0
        %557 = vmatpush1.bf16.msra.mxu0 0
        %558 = vmatprep.subr.bf16.mxu0 0
        %559 = vmatpush1.bf16.msra.mxu0 0
        %560 = vmatprep.subr.bf16.mxu0 0
        %561 = vmatpush1.bf16.msra.mxu0 0
        %562 = vmatprep.subr.bf16.mxu0 0
        %563 = vmatpush1.bf16.msra.mxu0 0
        %564 = vmatprep.subr.bf16.mxu0 0
        %565 = vmatpush1.bf16.msra.mxu0 0
        %566 = vmatprep.subr.bf16.mxu0 0
        %567 = vmatpush1.bf16.msra.mxu0 0
        %568 = vmatprep.subr.bf16.mxu0 0
        %569 = vmatpush1.bf16.msra.mxu0 0
        %570 = vmatprep.subr.bf16.mxu0 0
        %571 = vmatpush1.bf16.msra.mxu0 0
        %572 = vmatprep.subr.bf16.mxu0 0
        %573 = vmatpush1.bf16.msra.mxu0 0
        %574 = vmatprep.subr.bf16.mxu0 0
        %575 = vmatpush1.bf16.msra.mxu0 0
        %576 = vmatprep.subr.bf16.mxu0 0
        %577 = vmatpush1.bf16.msra.mxu0 0
        %578 = vmatprep.mubr.bf16.mxu0 0
        %579 = vmatmul.mubr.bf16.gmra.mrb[0].mxu0 %v544
        %v580 = vpop.f32.mrb[0].mxu0
        %v581 = vadd.f32 0.0, %v580
        %v582 = vpop.f32.mrb[0].mxu0
        %v583 = vpop.f32.mrb[0].mxu0
        %v584 = vadd.f32 0.0, %v583
        %v585 = vpop.f32.mrb[0].mxu0
        %586 = vdwg.mxu0
        %vm587 = vcmask 261120
        %v588 = vsel %vm587, %v581, -inf
        %v589 = vsel %vm587, %v584, -inf
        %v590 = vmax.f32 %v588, %v589
        %v591 = vrot.slane %v590, 4
        %v592 = vmax.f32 %v590, %v591
        %v593 = vrot.slane %v592, 2
        %v594 = vmax.f32 %v592, %v593
        %v595 = vrot.slane %v594, 1
        %v596 = vmax.f32 %v594, %v595
        %v597 = vpack.c.bf16 %v584, %v581
        %598 = vst.msk [vmem:[#allocation2] sm:$0xff] %vm587, %v597
        %v599 = vpack.c.bf16 %v596, %v596
        %v600 = vld [vmem:[%s5] sm:$0xf]
        %v601 = vld [vmem:[%s5 + $0x4] sm:$0xf]
        %v602 = vld [vmem:[%s5 + $0x8] sm:$0xf]
        %v603 = vld [vmem:[%s5 + $0xc] sm:$0xf]
        %v604 = vld [vmem:[%s6] sm:$0x1]
        %v609 = vunpack.c.l.b16 %v600
        %v610 = vunpack.c.l.b16 %v601
        %v611 = vunpack.c.l.b16 %v602
        %v612 = vunpack.c.l.b16 %v603
        %v613 = vpack.c.b16 %v610, %v609
        %v614 = vpack.c.b16 %v612, %v611
        %v618 = vsel %vm587, %v599, 0
        %620 = vmatprep.subr.bf16.mxu0 0
        %621 = vmatpush1.bf16.msra.mxu0 %v613
        %622 = vmatprep.subr.bf16.mxu0 0
        %623 = vmatpush1.bf16.msra.mxu0 %v614
        %624 = vmatprep.subr.bf16.mxu0 0
        %625 = vmatpush1.bf16.msra.mxu0 0
        %626 = vmatprep.subr.bf16.mxu0 0
        %627 = vmatpush1.bf16.msra.mxu0 0
        %628 = vmatprep.subr.bf16.mxu0 0
        %629 = vmatpush1.bf16.msra.mxu0 0
        %630 = vmatprep.subr.bf16.mxu0 0
        %631 = vmatpush1.bf16.msra.mxu0 0
        %632 = vmatprep.subr.bf16.mxu0 0
        %633 = vmatpush1.bf16.msra.mxu0 0
        %634 = vmatprep.subr.bf16.mxu0 0
        %635 = vmatpush1.bf16.msra.mxu0 0
        %636 = vmatprep.subr.bf16.mxu0 0
        %637 = vmatpush1.bf16.msra.mxu0 0
        %638 = vmatprep.subr.bf16.mxu0 0
        %639 = vmatpush1.bf16.msra.mxu0 0
        %640 = vmatprep.subr.bf16.mxu0 0
        %641 = vmatpush1.bf16.msra.mxu0 0
        %642 = vmatprep.subr.bf16.mxu0 0
        %643 = vmatpush1.bf16.msra.mxu0 0
        %644 = vmatprep.subr.bf16.mxu0 0
        %645 = vmatpush1.bf16.msra.mxu0 0
        %646 = vmatprep.subr.bf16.mxu0 0
        %647 = vmatpush1.bf16.msra.mxu0 0
        %648 = vmatprep.subr.bf16.mxu0 0
        %649 = vmatpush1.bf16.msra.mxu0 0
        %650 = vmatprep.subr.bf16.mxu0 0
        %651 = vmatpush1.bf16.msra.mxu0 0
        %652 = vmatprep.mubr.bf16.mxu0 0
        %653 = vmatmul.mubr.bf16.gmra.mrb[0].mxu0 %v618
        %v654 = vpop.f32.mrb[0].mxu0
        %v655 = vadd.f32 %v604, %v654
        %v656 = vpop.f32.mrb[0].mxu0
        %v657 = vpop.f32.mrb[0].mxu0
        %v658 = vpop.f32.mrb[0].mxu0
        %659 = vdwg.mxu0
        %v660 = vld [vmem:[#allocation9] sm:$0xf]
        %v661 = vld [vmem:[#allocation9 + $0x4] sm:$0xf]
        %v662 = vld [vmem:[#allocation9 + $0x8] sm:$0xf]
        %v663 = vld [vmem:[#allocation9 + $0xc] sm:$0xf]
        %v664 = vld [vmem:[#allocation11] sm:$0xf]
        %v665 = vld [vmem:[#allocation11 + $0x4] sm:$0xf]
        %v666 = vld [vmem:[#allocation11 + $0x8] sm:$0xf]
        %v667 = vld [vmem:[#allocation11 + $0xc] sm:$0xf]
        %v668 = vld [vmem:[#allocation2] sm:$0xff]
        %v673 = vunpack.c.l.b16 %v660
        %v674 = vunpack.c.l.b16 %v661
        %v675 = vunpack.c.l.b16 %v662
        %v676 = vunpack.c.l.b16 %v663
        %v677 = vpack.c.b16 %v674, %v673
        %v678 = vpack.c.b16 %v676, %v675
        %v682 = vsel %vm587, %v668, 0
        %684 = vmatprep.subr.bf16.mxu0 0
        %685 = vmatpush1.bf16.msra.mxu0 %v677
        %686 = vmatprep.subr.bf16.mxu0 0
        %687 = vmatpush1.bf16.msra.mxu0 %v678
        %688 = vmatprep.subr.bf16.mxu0 0
        %689 = vmatpush1.bf16.msra.mxu0 0
        %690 = vmatprep.subr.bf16.mxu0 0
        %691 = vmatpush1.bf16.msra.mxu0 0
        %692 = vmatprep.subr.bf16.mxu0 0
        %693 = vmatpush1.bf16.msra.mxu0 0
        %694 = vmatprep.subr.bf16.mxu0 0
        %695 = vmatpush1.bf16.msra.mxu0 0
        %696 = vmatprep.subr.bf16.mxu0 0
        %697 = vmatpush1.bf16.msra.mxu0 0
        %698 = vmatprep.subr.bf16.mxu0 0
        %699 = vmatpush1.bf16.msra.mxu0 0
        %700 = vmatprep.subr.bf16.mxu0 0
        %701 = vmatpush1.bf16.msra.mxu0 0
        %702 = vmatprep.subr.bf16.mxu0 0
        %703 = vmatpush1.bf16.msra.mxu0 0
        %704 = vmatprep.subr.bf16.mxu0 0
        %705 = vmatpush1.bf16.msra.mxu0 0
        %706 = vmatprep.subr.bf16.mxu0 0
        %707 = vmatpush1.bf16.msra.mxu0 0
        %708 = vmatprep.subr.bf16.mxu0 0
        %709 = vmatpush1.bf16.msra.mxu0 0
        %710 = vmatprep.subr.bf16.mxu0 0
        %711 = vmatpush1.bf16.msra.mxu0 0
        %712 = vmatprep.subr.bf16.mxu0 0
        %713 = vmatpush1.bf16.msra.mxu0 0
        %714 = vmatprep.subr.bf16.mxu0 0
        %715 = vmatpush1.bf16.msra.mxu0 0
        %716 = vmatprep.mubr.bf16.mxu0 0
        %717 = vmatmul.mubr.bf16.gmra.mrb[0].mxu0 %v682
        %v718 = vpop.f32.mrb[0].mxu0
        %v719 = vadd.f32 0.0, %v718
        %v720 = vpop.f32.mrb[0].mxu0
        %v721 = vpop.f32.mrb[0].mxu0
        %v722 = vadd.f32 0.0, %v721
        %v723 = vpop.f32.mrb[0].mxu0
        %724 = vdwg.mxu0
        %v725 = vlaneseq
        %v726 = vshrl.u32 %v725, 7
        %v727 = vsub.s32 0, %v726
        %v728 = vrot.slane %v655, %v727
        %v729 = vadd.f32 %v719, %v728
        %v730 = vadd.f32 %v722, %v728
        %v731 = vmax.f32 %v729, 0.0
        %v732 = vmax.f32 %v730, 0.0
        %v733 = vpack.c.bf16 %v732, %v731
        %v738 = vunpack.c.l.b16 %v664
        %v739 = vunpack.c.l.b16 %v665
        %v740 = vunpack.c.l.b16 %v666
        %v741 = vunpack.c.l.b16 %v667
        %v742 = vpack.c.b16 %v739, %v738
        %v743 = vpack.c.b16 %v741, %v740
        %v747 = vsel %vm587, %v733, 0
        %749 = vmatprep.subr.bf16.mxu0 0
        %750 = vmatpush1.bf16.msra.mxu0 %v742
        %751 = vmatprep.subr.bf16.mxu0 0
        %752 = vmatpush1.bf16.msra.mxu0 %v743
        %753 = vmatprep.subr.bf16.mxu0 0
        %754 = vmatpush1.bf16.msra.mxu0 0
        %755 = vmatprep.subr.bf16.mxu0 0
        %756 = vmatpush1.bf16.msra.mxu0 0
        %757 = vmatprep.subr.bf16.mxu0 0
        %758 = vmatpush1.bf16.msra.mxu0 0
        %759 = vmatprep.subr.bf16.mxu0 0
        %760 = vmatpush1.bf16.msra.mxu0 0
        %761 = vmatprep.subr.bf16.mxu0 0
        %762 = vmatpush1.bf16.msra.mxu0 0
        %763 = vmatprep.subr.bf16.mxu0 0
        %764 = vmatpush1.bf16.msra.mxu0 0
        %765 = vmatprep.subr.bf16.mxu0 0
        %766 = vmatpush1.bf16.msra.mxu0 0
        %767 = vmatprep.subr.bf16.mxu0 0
        %768 = vmatpush1.bf16.msra.mxu0 0
        %769 = vmatprep.subr.bf16.mxu0 0
        %770 = vmatpush1.bf16.msra.mxu0 0
        %771 = vmatprep.subr.bf16.mxu0 0
        %772 = vmatpush1.bf16.msra.mxu0 0
        %773 = vmatprep.subr.bf16.mxu0 0
        %774 = vmatpush1.bf16.msra.mxu0 0
        %775 = vmatprep.subr.bf16.mxu0 0
        %776 = vmatpush1.bf16.msra.mxu0 0
        %777 = vmatprep.subr.bf16.mxu0 0
        %778 = vmatpush1.bf16.msra.mxu0 0
        %779 = vmatprep.subr.bf16.mxu0 0
        %780 = vmatpush1.bf16.msra.mxu0 0
        %781 = vmatprep.mubr.bf16.mxu0 0
        %782 = vmatmul.mubr.bf16.gmra.mrb[0].mxu0 %v747
        %v783 = vpop.f32.mrb[0].mxu0
        %v784 = vadd.f32 0.0, %v783
        %v785 = vpop.f32.mrb[0].mxu0
        %v786 = vpop.f32.mrb[0].mxu0
        %v787 = vadd.f32 0.0, %v786
        %v788 = vpop.f32.mrb[0].mxu0
        %789 = vdwg.mxu0
        %v790 = vmax.f32 %v784, %v787
        %v791 = vrot.slane %v790, 4
        %v792 = vmax.f32 %v790, %v791
        %v793 = vrot.slane %v792, 2
        %v794 = vmax.f32 %v792, %v793
        %v795 = vrot.slane %v794, 1
        %v796 = vmax.f32 %v794, %v795
        %v797 = vld [vmem:[%s8] sm:$0x1]
        %v798 = vadd.f32 %v796, %v797
        %799 = vst [vmem:[%s402] sm:$0x1] %v798
        %s800 = sand.u32 %s230, 1
        %s801 = scalar_lea.sflag [#allocation5], %s800
        %s802 = sand.u32 %s230, 1
        %s803 = scalar_lea.vmem [#allocation12], %s802
        // Predicated region
        $region77: #{tpu_custom_call.1} parent=55 // pred_check
          %p804 = pneg %p240
        $region78: #{tpu_custom_call.1} parent=55 // pred_check_branch
          %806 = sbr.rel (%p804) target = $region80
        $region79: #{tpu_custom_call.1} parent=55 // pred_region
          %s808 = ssub.s32 16, 16
          %809 = vsyncadd %s801, %s808
          %s810 = smul.addr %s28, 16
          %s811 = scalar_lea.hbm %s9, %s810
          %s813 = sshll.u32 %s803, 4
          %s814 = int_to_ptr.vmem [resolvable:$true] %s813
          %816 = dma.vmem_to_hbm [thread:$0]  %s814, 16, %s811, %s801
        $region80: #{tpu_custom_call.1} parent=55 // pred_fallthru
          _
      $region56: #{tpu_custom_call.1} parent=5 // pred_fallthru
        _
      %p817 = scmp.le.s32.totalorder 2, %s23
      // Predicated region
      $region81: #{tpu_custom_call.1} parent=5 // pred_check
        %p818 = pneg %p817
      $region82: #{tpu_custom_call.1} parent=5 // pred_check_branch
        %820 = sbr.rel (%p818) target = $region84
      $region83: #{tpu_custom_call.1} parent=5 // pred_region
        %s821 = ssub.s32 %s23, 2
        // Predicated region
        $region85: #{tpu_custom_call.1} parent=83 // pred_check
          %p822 = pneg %p246
        $region86: #{tpu_custom_call.1} parent=83 // pred_check_branch
          %824 = sbr.rel (%p822) target = $region88
        $region87: #{tpu_custom_call.1} parent=83 // pred_region
          %s825 = sand.u32 %s231, 1
          %s826 = scalar_lea.sflag [#allocation5], %s825
          %s827 = sand.u32 %s231, 1
          %s828 = scalar_lea.vmem [#allocation12], %s827
          %829 = dma.done %s826, 16
        $region88: #{tpu_custom_call.1} parent=83 // pred_fallthru
          _
      $region84: #{tpu_custom_call.1} parent=5 // pred_fallthru
        _
    $region6: #{tpu_custom_call.1} parent=1 // loop_footer
      %s27 = sadd.s32 1, %s23
    $region7: #{tpu_custom_call.1} parent=1 // loop_footer_branch
      %22 = sbr.rel target = $region3
    $region8: #{tpu_custom_call.1} parent=1 // loop_exit
      _
    %830 = vsyncpa [#allocation4], 1
    %s831 = scalar_lea.sflag [#allocation4], 1
    %832 = vsyncpa %s831, 1
    %833 = vsyncpa [#allocation7], 1
    %834 = vsyncpa [#allocation10], 1
    %835 = vsyncpa [#allocation5], 1
    %s836 = scalar_lea.sflag [#allocation5], 1
    %837 = vsyncpa %s836, 1

</llo_original>
